<compile_context>
chip_gen: v5e
topology: v5e:2x2
jax: 0.10.0
libtpu: 0.0.40
codegen_flags: <defaults>
</compile_context>

<pallas_src>
import jax
import jax.numpy as jnp
from jax.experimental import pallas as pl
from jax.experimental.pallas import tpu as pltpu


def conv1x1_pad1_minus_kernel(w_ref, b_ref, x_ref, o_ref):
    # w_ref: (7, 3)   VMEM  conv weights
    # b_ref: (7, 1)   VMEM  bias - 0.37 (constant already folded in)
    # x_ref: (3, 576) VMEM  zero-padded input planes, spatial flattened (24*24)
    # o_ref: (7, 576) VMEM  output planes, spatial flattened (24*24)
    xp = x_ref[...]          # (3, 576)
    w = w_ref[...]           # (7, 3)
    b = b_ref[...]           # (7, 1)
    # Broadcasted VPU contraction over Cin == 3 (MXU skipped on purpose):
    # (7,1) * (1,576) -> (7,576), three FMAs + bias, stored lane-dense.
    o_ref[...] = (w[:, 0:1] * xp[0:1, :]
                  + w[:, 1:2] * xp[1:2, :]
                  + w[:, 2:3] * xp[2:3, :]
                  + b)


def conv1x1_pad1_minus(x_nchw, weight, bias):
    """x_nchw: (1, Cin, H, W); weight: (Cout, Cin, 1, 1); bias: (Cout,)."""
    n, cin, h, w = x_nchw.shape
    cout = weight.shape[0]
    assert n == 1 and cin == 3 and cout == 7 and (h, w) == (22, 22)
    hp, wp = h + 2, w + 2
    hw = hp * wp  # 576

    # Zero-pad once on the host (~7 KB). Through a 1x1 conv this makes every
    # border pixel exactly bias - 0.37, so the kernel needs no special cases.
    x_pad = jnp.pad(x_nchw.reshape(cin, h, w), ((0, 0), (1, 1), (1, 1)))
    x_flat = x_pad.reshape(cin, hw)                       # lane-dense (3, 576)

    w_mat = weight.reshape(cout, cin).astype(jnp.float32)             # (7, 3)
    b_fold = (bias.astype(jnp.float32) - jnp.float32(0.37)).reshape(cout, 1)

    out = pl.pallas_call(
        conv1x1_pad1_minus_kernel,
        out_shape=jax.ShapeDtypeStruct((cout, hw), jnp.float32),
        in_specs=[
            pl.BlockSpec(memory_space=pltpu.MemorySpace.VMEM),   # weights
            pl.BlockSpec(memory_space=pltpu.MemorySpace.VMEM),   # folded bias
            pl.BlockSpec(memory_space=pltpu.MemorySpace.VMEM),   # padded input
        ],
        out_specs=pl.BlockSpec(memory_space=pltpu.MemorySpace.VMEM),
        cost_estimate=pl.CostEstimate(
            flops=2 * hw * cin * cout,
            transcendentals=0,
            bytes_accessed=(cin * hw + cout * hw + cout * cin + cout) * 4,
        ),
    )(w_mat, b_fold, x_flat)

    return out.reshape(1, cout, hp, wp)                   # free reshape to NCHW


if __name__ == "__main__":
    key = jax.random.PRNGKey(0)
    k_x, k_w, k_b = jax.random.split(key, 3)

    # Input matching the module: (1, 3, 22, 22)
    x = jax.random.normal(k_x, (1, 3, 22, 22), dtype=jnp.float32)

    # Deterministic parameter init (Conv2d(3, 7, 1) shapes).
    cin, cout = 3, 7
    fan_in = cin * 1 * 1
    bound = 1.0 / (fan_in ** 0.5)
    weight = jax.random.uniform(k_w, (cout, cin, 1, 1),
                                minval=-bound, maxval=bound,
                                dtype=jnp.float32)
    bias = jax.random.uniform(k_b, (cout,),
                              minval=-bound, maxval=bound,
                              dtype=jnp.float32)

    out = conv1x1_pad1_minus(x, weight, bias)
    jax.block_until_ready(out)

    # Sanity check against pure-JAX reference.
    xp = jnp.pad(x, ((0, 0), (0, 0), (1, 1), (1, 1)))
    ref = (jnp.einsum("nchw,oc->nohw", xp, weight.reshape(cout, cin))
           + bias.reshape(1, cout, 1, 1)) - 0.37
    assert out.shape == (1, 7, 24, 24), out.shape
    assert jnp.allclose(out, ref, atol=1e-5, rtol=1e-5)

    print("KERNEL_OK")
</pallas_src>

<mosaic_0001>
module attributes {stable_mosaic.version = 11 : i64} {
  func.func @conv1x1_pad1_minus_kernel(%arg0: memref<7x3xf32, #tpu.memory_space<vmem>>, %arg1: memref<7x1xf32, #tpu.memory_space<vmem>>, %arg2: memref<3x576xf32, #tpu.memory_space<vmem>>, %arg3: memref<7x576xf32, #tpu.memory_space<vmem>>) attributes {dimension_semantics = [], scalar_prefetch = 0 : i64, scratch_operands = 0 : i64, tpu.core_type = #tpu.core_type<tc>} {
    %c0 = arith.constant 0 : index
    %c0_0 = arith.constant 0 : index
    %0 = vector.load %arg2[%c0, %c0_0] : memref<3x576xf32, #tpu.memory_space<vmem>>, vector<3x576xf32>
    %c0_1 = arith.constant 0 : index
    %c0_2 = arith.constant 0 : index
    %1 = vector.load %arg0[%c0_1, %c0_2] : memref<7x3xf32, #tpu.memory_space<vmem>>, vector<7x3xf32>
    %c0_3 = arith.constant 0 : index
    %c0_4 = arith.constant 0 : index
    %2 = vector.load %arg1[%c0_3, %c0_4] : memref<7x1xf32, #tpu.memory_space<vmem>>, vector<7x1xf32>
    %3 = vector.extract_strided_slice %1 {offsets = [0, 0], sizes = [7, 1], strides = [1, 1]} : vector<7x3xf32> to vector<7x1xf32>
    %4 = vector.extract_strided_slice %0 {offsets = [0, 0], sizes = [1, 576], strides = [1, 1]} : vector<3x576xf32> to vector<1x576xf32>
    %5 = vector.broadcast %3 : vector<7x1xf32> to vector<7x576xf32>
    %6 = vector.broadcast %4 : vector<1x576xf32> to vector<7x576xf32>
    %7 = arith.mulf %5, %6 : vector<7x576xf32>
    %8 = vector.extract_strided_slice %1 {offsets = [0, 1], sizes = [7, 1], strides = [1, 1]} : vector<7x3xf32> to vector<7x1xf32>
    %9 = vector.extract_strided_slice %0 {offsets = [1, 0], sizes = [1, 576], strides = [1, 1]} : vector<3x576xf32> to vector<1x576xf32>
    %10 = vector.broadcast %8 : vector<7x1xf32> to vector<7x576xf32>
    %11 = vector.broadcast %9 : vector<1x576xf32> to vector<7x576xf32>
    %12 = arith.mulf %10, %11 : vector<7x576xf32>
    %13 = arith.addf %7, %12 : vector<7x576xf32>
    %14 = vector.extract_strided_slice %1 {offsets = [0, 2], sizes = [7, 1], strides = [1, 1]} : vector<7x3xf32> to vector<7x1xf32>
    %15 = vector.extract_strided_slice %0 {offsets = [2, 0], sizes = [1, 576], strides = [1, 1]} : vector<3x576xf32> to vector<1x576xf32>
    %16 = vector.broadcast %14 : vector<7x1xf32> to vector<7x576xf32>
    %17 = vector.broadcast %15 : vector<1x576xf32> to vector<7x576xf32>
    %18 = arith.mulf %16, %17 : vector<7x576xf32>
    %19 = arith.addf %13, %18 : vector<7x576xf32>
    %20 = vector.broadcast %2 : vector<7x1xf32> to vector<7x576xf32>
    %21 = arith.addf %19, %20 : vector<7x576xf32>
    %c0_5 = arith.constant 0 : index
    %c0_6 = arith.constant 0 : index
    %22 = vector.load %arg3[%c0_5, %c0_6] : memref<7x576xf32, #tpu.memory_space<vmem>>, vector<7x576xf32>
    tpu.vector_store %arg3[%c0_5, %c0_6], %21 {strides = array<i32>} : memref<7x576xf32, #tpu.memory_space<vmem>>, vector<7x576xf32>,
    return
  }
}

</mosaic_0001>

<llo_original>
// kernel: tpu_custom_call.1
$region0: #{tpu_custom_call.1}
  #allocation0 [shape = 'u32[]', space=smem, size = 0x4, offset = 0x4, fixed_abs, tag = 'smem constant byte address 0x4 - core index']
  #allocation1 [shape = 'u32[72,128]{1,0:T(1,128)}', space=vmem, size = 0x9000, scoped, tag = 'internal scratch']
  %s0 = inlined_call_operand.vmem [shape: f32[7,3], index: 0, kind: input, shape index: {}]
  %s1 = inlined_call_operand.vmem [shape: f32[7,1], index: 1, kind: input, shape index: {}]
  %s2 = inlined_call_operand.vmem [shape: f32[3,576], index: 2, kind: input, shape index: {}]
  %s3 = inlined_call_operand.hbm [shape: f32[7,576], index: 3, kind: output, shape index: {}]
  %s4 = sld [smem:[#allocation0]]
  $region22: #{tpu_custom_call.1} parent=0
    _
  %s6 = ssub.s32 1, %s4
  %s7 = scalar_select 0, %s6, %s4
  $region1: #{tpu_custom_call.1} parent=0
    #allocation2 [shape = 'u8[20480]{0}', space=vmem, size = 0x5000, scoped, tag = 'output window, operand 0, single buffered']
    #allocation3 [shape = 's32[1]{0}', space=sflag, size = 0x4, scoped, tag = 'scoped memory for tpu_custom_call.1']
    %8 = vsyncpa [#allocation3], 0
    // Predicated region
    $region2: #{tpu_custom_call.1} parent=1 // pred_check
      _
    $region3: #{tpu_custom_call.1} parent=1 // pred_check_branch
      %10 = sbr.rel (0) target = $region5
    $region4: #{tpu_custom_call.1} parent=1 // pred_region
      _
    $region5: #{tpu_custom_call.1} parent=1 // pred_fallthru
      _
    // Predicated region
    $region6: #{tpu_custom_call.1} parent=1 // pred_check
      _
    $region7: #{tpu_custom_call.1} parent=1 // pred_check_branch
      %12 = sbr.rel (0) target = $region9
    $region8: #{tpu_custom_call.1} parent=1 // pred_region
      _
    $region9: #{tpu_custom_call.1} parent=1 // pred_fallthru
      _
    // Predicated region
    $region10: #{tpu_custom_call.1} parent=1 // pred_check
      _
    $region11: #{tpu_custom_call.1} parent=1 // pred_check_branch
      %14 = sbr.rel (0) target = $region13
    $region12: #{tpu_custom_call.1} parent=1 // pred_region
      _
    $region13: #{tpu_custom_call.1} parent=1 // pred_fallthru
      _
    %v15 = vld [vmem:[%s2] sm:$0x77]
    %v16 = vld [vmem:[%s2 + $0x8] sm:$0x77]
    %v17 = vld [vmem:[%s2 + $0x10] sm:$0x7]
    %v18 = vld [vmem:[%s0] sm:$0x7f]
    %v19 = vld [vmem:[%s1] sm:$0x7f]
    %21 = vset.pattern.permute.xlu0 0
    %22 = vperm.xlu0 %21, %v18
    %v23 = vpop.permute.xlu0 %22
    %v28 = vperm.slane %v15, 0
    %v29 = vperm.slane %v15, 4
    %v30 = vperm.slane %v16, 0
    %v31 = vperm.slane %v16, 4
    %v32 = vperm.slane %v17, 0
    %v38 = vperm.slane %v28, 0
    %v39 = vperm.slane %v29, 0
    %v40 = vperm.slane %v30, 0
    %v41 = vperm.slane %v31, 0
    %v42 = vperm.slane %v32, 0
    %v43 = vmul.f32 %v23, %v38
    %v44 = vmul.f32 %v23, %v39
    %v45 = vmul.f32 %v23, %v40
    %v46 = vmul.f32 %v23, %v41
    %v47 = vmul.f32 %v23, %v42
    %48 = vset.pattern.permute.xlu0 1
    %49 = vperm.xlu0 %48, %v18
    %v50 = vpop.permute.xlu0 %49
    %v52 = vperm.slane %v15, 1
    %v53 = vperm.slane %v15, 5
    %v54 = vperm.slane %v16, 1
    %v55 = vperm.slane %v16, 5
    %v56 = vperm.slane %v17, 1
    %v62 = vperm.slane %v52, 1
    %v63 = vperm.slane %v53, 1
    %v64 = vperm.slane %v54, 1
    %v65 = vperm.slane %v55, 1
    %v66 = vperm.slane %v56, 1
    %v67 = vmul.f32 %v50, %v62
    %v68 = vmul.f32 %v50, %v63
    %v69 = vmul.f32 %v50, %v64
    %v70 = vmul.f32 %v50, %v65
    %v71 = vmul.f32 %v50, %v66
    %v72 = vadd.f32 %v43, %v67
    %v73 = vadd.f32 %v44, %v68
    %v74 = vadd.f32 %v45, %v69
    %v75 = vadd.f32 %v46, %v70
    %v76 = vadd.f32 %v47, %v71
    %77 = vset.pattern.permute.xlu0 2
    %78 = vperm.xlu0 %77, %v18
    %v79 = vpop.permute.xlu0 %78
    %v81 = vperm.slane %v15, 2
    %v82 = vperm.slane %v15, 6
    %v83 = vperm.slane %v16, 2
    %v84 = vperm.slane %v16, 6
    %v85 = vperm.slane %v17, 2
    %v91 = vperm.slane %v81, 2
    %v92 = vperm.slane %v82, 2
    %v93 = vperm.slane %v83, 2
    %v94 = vperm.slane %v84, 2
    %v95 = vperm.slane %v85, 2
    %v96 = vmul.f32 %v79, %v91
    %v97 = vmul.f32 %v79, %v92
    %v98 = vmul.f32 %v79, %v93
    %v99 = vmul.f32 %v79, %v94
    %v100 = vmul.f32 %v79, %v95
    %v101 = vadd.f32 %v72, %v96
    %v102 = vadd.f32 %v73, %v97
    %v103 = vadd.f32 %v74, %v98
    %v104 = vadd.f32 %v75, %v99
    %v105 = vadd.f32 %v76, %v100
    %107 = vset.pattern.permute.xlu0 0
    %108 = vperm.xlu0 %107, %v19
    %v109 = vpop.permute.xlu0 %108
    %v111 = vadd.f32 %v101, %v109
    %v112 = vadd.f32 %v102, %v109
    %v113 = vadd.f32 %v103, %v109
    %v114 = vadd.f32 %v104, %v109
    %v115 = vadd.f32 %v105, %v109
    %116 = vst [vmem:[#allocation2] sm:$0x7f] %v111
    %117 = vst [vmem:[#allocation2 + $0x8] sm:$0x7f] %v112
    %118 = vst [vmem:[#allocation2 + $0x10] sm:$0x7f] %v113
    %119 = vst [vmem:[#allocation2 + $0x18] sm:$0x7f] %v114
    %vm120 = vcmask 522240
    %121 = vst.msk [vmem:[#allocation2 + $0x20] sm:$0x7f] %vm120, %v115
    // Predicated region
    $region14: #{tpu_custom_call.1} parent=1 // pred_check
      _
    $region15: #{tpu_custom_call.1} parent=1 // pred_check_branch
      %123 = sbr.rel (0) target = $region17
    $region16: #{tpu_custom_call.1} parent=1 // pred_region
      %125 = vsyncadd [#allocation3], 0
      %s127 = sshll.u32 [#allocation2], 4
      %s128 = int_to_ptr.vmem [resolvable:$true] %s127
      %s129 = sshll.u32 %s3, 4
      %s130 = int_to_ptr.hbm [resolvable:$true] %s129
      %132 = dma.vmem_to_hbm [thread:$0]  %s128, 640, %s130, [#allocation3]
    $region17: #{tpu_custom_call.1} parent=1 // pred_fallthru
      _
    // Predicated region
    $region18: #{tpu_custom_call.1} parent=1 // pred_check
      _
    $region19: #{tpu_custom_call.1} parent=1 // pred_check_branch
      %134 = sbr.rel (0) target = $region21
    $region20: #{tpu_custom_call.1} parent=1 // pred_region
      %136 = dma.done [#allocation3], 640
    $region21: #{tpu_custom_call.1} parent=1 // pred_fallthru
      _
    %137 = vsyncpa [#allocation3], 1

</llo_original>
